<compile_context>
chip_gen: v5e
topology: v5e:2x2
jax: 0.10.0
libtpu: 0.0.40
codegen_flags: <defaults>
</compile_context>

<pallas_src>
import jax
import jax.numpy as jnp
from jax.experimental import pallas as pl
from jax.experimental.pallas import tpu as pltpu

KNW_CLASS_NUM = 10
FEATURE_DIM = 256
TEMPERATURE = 0.05
EPS = 1e-12  # F.normalize default eps
MAX_TILE_B = 1024  # rows per grid step (multiple of 8 for f32 sublanes)


def _gs_kernel(x_ref, wt_ref, o_ref):
    # x_ref: (TILE_B, F) block, wt_ref: (F, C) resident block, o_ref: (TILE_B, C)
    x = x_ref[...]
    # L2 normalize along features: x / max(||x||, eps) == x * rsqrt(max(||x||^2, eps^2))
    sq = jnp.sum(x * x, axis=-1, keepdims=True)
    inv_norm = jax.lax.rsqrt(jnp.maximum(sq, EPS * EPS))
    xn = x * inv_norm
    # Linear (no bias) on the MXU; 1/temperature already folded into wt.
    o_ref[...] = jnp.dot(
        xn, wt_ref[...], preferred_element_type=jnp.float32
    ).astype(o_ref.dtype)


def gs_forward(x, weight, reverse=False):
    """Pallas implementation of Gs.forward.

    x:       (B, 256) float32
    weight:  (10, 256) float32  (nn.Linear weight layout: (out, in))
    reverse: ignored for forward values (GRL scales grads only; constant=1).
    """
    del reverse  # forward value is unchanged by the gradient reversal layer
    B, F = x.shape
    C, F2 = weight.shape
    assert F == F2 == FEATURE_DIM and C == KNW_CLASS_NUM

    x = x.astype(jnp.float32)
    # Pre-transpose and fold the temperature scale into the (tiny) weight.
    wt = (weight.T * (1.0 / TEMPERATURE)).astype(jnp.float32)  # (F, C)

    # Tile over the batch; keep sublane alignment (multiple of 8 for f32).
    tile_b = min(MAX_TILE_B, max(8, ((B + 7) // 8) * 8))
    num_tiles = pl.cdiv(B, tile_b)
    padded_b = num_tiles * tile_b
    if padded_b != B:
        x = jnp.pad(x, ((0, padded_b - B), (0, 0)))

    out = pl.pallas_call(
        _gs_kernel,
        out_shape=jax.ShapeDtypeStruct((padded_b, C), jnp.float32),
        grid_spec=pltpu.PrefetchScalarGridSpec(
            num_scalar_prefetch=0,
            grid=(num_tiles,),
            in_specs=[
                pl.BlockSpec((tile_b, F), lambda i: (i, 0)),
                pl.BlockSpec((F, C), lambda i: (0, 0)),  # weight stays resident
            ],
            out_specs=pl.BlockSpec((tile_b, C), lambda i: (i, 0)),
        ),
        compiler_params=pltpu.CompilerParams(
            dimension_semantics=("parallel",),  # megacore sharding on v7x
            vmem_limit_bytes=64 * 1024 * 1024,
        ),
    )(x, wt)

    return out[:B] if padded_b != B else out


def gs_reference(x, weight):
    xn = x / jnp.maximum(
        jnp.sqrt(jnp.sum(x * x, axis=-1, keepdims=True)), EPS)
    return (xn @ weight.T) / TEMPERATURE


if __name__ == "__main__":
    key = jax.random.PRNGKey(0)
    kx, kw = jax.random.split(key)

    B = 8
    x = jax.random.normal(kx, (B, FEATURE_DIM), dtype=jnp.float32)
    # Deterministic synthetic init for the Linear(256 -> 10, bias=False) weight.
    bound = 1.0 / (FEATURE_DIM ** 0.5)
    weight = jax.random.uniform(
        kw, (KNW_CLASS_NUM, FEATURE_DIM), dtype=jnp.float32,
        minval=-bound, maxval=bound)

    out = gs_forward(x, weight)
    out = jax.block_until_ready(out)

    ref = gs_reference(x, weight)
    assert out.shape == (B, KNW_CLASS_NUM)
    assert jnp.allclose(out, ref, atol=1e-3, rtol=1e-3), "mismatch vs reference"

    print("KERNEL_OK")
</pallas_src>

<mosaic_0001>
module attributes {stable_mosaic.version = 11 : i64} {
  func.func @_gs_kernel(%arg0: i32, %arg1: memref<8x256xf32, #tpu.memory_space<vmem>>, %arg2: memref<256x10xf32, #tpu.memory_space<vmem>>, %arg3: memref<8x10xf32, #tpu.memory_space<vmem>>) attributes {dimension_semantics = [#tpu.dimension_semantics<parallel>], iteration_bounds = array<i64: 1>, scalar_prefetch = 0 : i64, scratch_operands = 0 : i64, tpu.core_type = #tpu.core_type<tc>, window_params = [{transform_indices = @transform_0, window_bounds = array<i64: 8, 256>}, {pipeline_mode = #tpu.pipeline_mode<synchronous>, transform_indices = @transform_1, window_bounds = array<i64: 256, 10>}, {transform_indices = @transform_2, window_bounds = array<i64: 8, 10>}]} {
    %c0 = arith.constant 0 : index
    %c0_0 = arith.constant 0 : index
    %0 = vector.load %arg1[%c0, %c0_0] : memref<8x256xf32, #tpu.memory_space<vmem>>, vector<8x256xf32>
    %1 = arith.mulf %0, %0 : vector<8x256xf32>
    %cst = arith.constant dense<0.000000e+00> : vector<8xf32>
    %2 = vector.multi_reduction <add>, %1, %cst [1] : vector<8x256xf32> to vector<8xf32>
    %3 = vector.shape_cast %2 : vector<8xf32> to vector<8x1xf32>
    %cst_1 = arith.constant 1.000000e-24 : f32
    %4 = vector.broadcast %cst_1 : f32 to vector<8x1xf32>
    %5 = arith.maximumf %3, %4 : vector<8x1xf32>
    %6 = math.rsqrt %5 : vector<8x1xf32>
    %7 = vector.broadcast %6 : vector<8x1xf32> to vector<8x256xf32>
    %8 = arith.mulf %0, %7 : vector<8x256xf32>
    %c0_2 = arith.constant 0 : index
    %c0_3 = arith.constant 0 : index
    %9 = vector.load %arg2[%c0_2, %c0_3] : memref<256x10xf32, #tpu.memory_space<vmem>>, vector<256x10xf32>
    %cst_4 = arith.constant dense<0.000000e+00> : vector<8x10xf32>
    %10 = tpu.matmul %8, %9, %cst_4 {dimension_numbers = #tpu.dot_dimension_numbers<[1], [0], [0], [1], [0, 0, 1, 1], [], []>} : vector<8x256xf32>, vector<256x10xf32>, vector<8x10xf32> -> vector<8x10xf32>
    %c0_5 = arith.constant 0 : index
    %c0_6 = arith.constant 0 : index
    %11 = vector.load %arg3[%c0_5, %c0_6] : memref<8x10xf32, #tpu.memory_space<vmem>>, vector<8x10xf32>
    tpu.vector_store %arg3[%c0_5, %c0_6], %10 {strides = array<i32>} : memref<8x10xf32, #tpu.memory_space<vmem>>, vector<8x10xf32>,
    return
  }
  func.func @transform_0(%arg0: i32) -> (i32, i32) {
    %c0_i32 = arith.constant 0 : i32
    %c0_i32_0 = arith.constant 0 : i32
    return %arg0, %c0_i32 : i32, i32
  }
  func.func @transform_1(%arg0: i32) -> (i32, i32) {
    %c0_i32 = arith.constant 0 : i32
    %c0_i32_0 = arith.constant 0 : i32
    %c0_i32_1 = arith.constant 0 : i32
    return %c0_i32, %c0_i32_0 : i32, i32
  }
  func.func @transform_2(%arg0: i32) -> (i32, i32) {
    %c0_i32 = arith.constant 0 : i32
    %c0_i32_0 = arith.constant 0 : i32
    return %arg0, %c0_i32 : i32, i32
  }
}

</mosaic_0001>

<llo_original>
// kernel: tpu_custom_call.1
$region0: #{tpu_custom_call.1}
  #allocation0 [shape = 'u32[]', space=smem, size = 0x4, offset = 0x4, fixed_abs, tag = 'smem constant byte address 0x4 - core index']
  #allocation1 [shape = 'u32[72,128]{1,0:T(1,128)}', space=vmem, size = 0x9000, scoped, tag = 'internal scratch']
  %s0 = inlined_call_operand.vmem [shape: f32[8,256], index: 0, kind: input, shape index: {}]
  %s1 = inlined_call_operand.vmem [shape: f32[256,10], index: 1, kind: input, shape index: {}]
  %s2 = inlined_call_operand.hbm [shape: f32[8,10], index: 2, kind: output, shape index: {}]
  %s3 = sld [smem:[#allocation0]]
  $region18: #{tpu_custom_call.1} parent=0
    _
  %s5 = ssub.s32 1, %s3
  %s6 = scalar_select 0, %s5, %s3
  $region1: #{tpu_custom_call.1} parent=0
    #allocation2 [shape = 'u8[4096]{0}', space=vmem, size = 0x1000, scoped, tag = 'output window, operand 0, single buffered']
    #allocation3 [shape = 's32[1]{0}', space=sflag, size = 0x4, scoped, tag = 'scoped memory for tpu_custom_call.1']
    %7 = vsyncpa [#allocation3], 0
    // Predicated region
    $region2: #{tpu_custom_call.1} parent=1 // pred_check
      _
    $region3: #{tpu_custom_call.1} parent=1 // pred_check_branch
      %9 = sbr.rel (0) target = $region5
    $region4: #{tpu_custom_call.1} parent=1 // pred_region
      _
    $region5: #{tpu_custom_call.1} parent=1 // pred_fallthru
      _
    // Predicated region
    $region6: #{tpu_custom_call.1} parent=1 // pred_check
      _
    $region7: #{tpu_custom_call.1} parent=1 // pred_check_branch
      %11 = sbr.rel (0) target = $region9
    $region8: #{tpu_custom_call.1} parent=1 // pred_region
      _
    $region9: #{tpu_custom_call.1} parent=1 // pred_fallthru
      _
    %v12 = vld [vmem:[%s0] sm:$0xff]
    %v13 = vld [vmem:[%s0 + $0x8] sm:$0xff]
    %v14 = vmul.f32 %v12, %v12
    %v15 = vmul.f32 %v13, %v13
    %v16 = vadd.f32 %v14, %v15
    %17 = vadd.xlane.f32.xlu0 %v16
    %v18 = vpop.xlane.xlu0 %17
    %v19 = vmax.f32 %v18, 1e-24
    %v20 = vrsqrt.pop %v19
    %v21 = vmul.f32 %v20, %v19
    %v22 = vmul.f32 %v21, %v20
    %v23 = vmul.f32 0.5, %v22
    %v24 = vsub.f32 1.5, %v23
    %v25 = vmul.f32 %v20, %v24
    %vm26 = vweird.f32 %v19
    %vm27 = vweird.f32 %v20
    %vm28 = vmor %vm26, %vm27
    %v29 = vsel %vm28, %v20, %v25
    %v30 = vmul.f32 %v12, %v29
    %v31 = vmul.f32 %v13, %v29
    %v32 = vld [vmem:[%s1] sm:$0xff]
    %v33 = vld [vmem:[%s1 + $0x8] sm:$0xff]
    %v34 = vld [vmem:[%s1 + $0x10] sm:$0xff]
    %v35 = vld [vmem:[%s1 + $0x18] sm:$0xff]
    %v36 = vld [vmem:[%s1 + $0x20] sm:$0xff]
    %v37 = vld [vmem:[%s1 + $0x28] sm:$0xff]
    %v38 = vld [vmem:[%s1 + $0x30] sm:$0xff]
    %v39 = vld [vmem:[%s1 + $0x38] sm:$0xff]
    %v40 = vld [vmem:[%s1 + $0x40] sm:$0xff]
    %v41 = vld [vmem:[%s1 + $0x48] sm:$0xff]
    %v42 = vld [vmem:[%s1 + $0x50] sm:$0xff]
    %v43 = vld [vmem:[%s1 + $0x58] sm:$0xff]
    %v44 = vld [vmem:[%s1 + $0x60] sm:$0xff]
    %v45 = vld [vmem:[%s1 + $0x68] sm:$0xff]
    %v46 = vld [vmem:[%s1 + $0x70] sm:$0xff]
    %v47 = vld [vmem:[%s1 + $0x78] sm:$0xff]
    %v48 = vld [vmem:[%s1 + $0x80] sm:$0xff]
    %v49 = vld [vmem:[%s1 + $0x88] sm:$0xff]
    %v50 = vld [vmem:[%s1 + $0x90] sm:$0xff]
    %v51 = vld [vmem:[%s1 + $0x98] sm:$0xff]
    %v52 = vld [vmem:[%s1 + $0xa0] sm:$0xff]
    %v53 = vld [vmem:[%s1 + $0xa8] sm:$0xff]
    %v54 = vld [vmem:[%s1 + $0xb0] sm:$0xff]
    %v55 = vld [vmem:[%s1 + $0xb8] sm:$0xff]
    %v56 = vld [vmem:[%s1 + $0xc0] sm:$0xff]
    %v57 = vld [vmem:[%s1 + $0xc8] sm:$0xff]
    %v58 = vld [vmem:[%s1 + $0xd0] sm:$0xff]
    %v59 = vld [vmem:[%s1 + $0xd8] sm:$0xff]
    %v60 = vld [vmem:[%s1 + $0xe0] sm:$0xff]
    %v61 = vld [vmem:[%s1 + $0xe8] sm:$0xff]
    %v62 = vld [vmem:[%s1 + $0xf0] sm:$0xff]
    %v63 = vld [vmem:[%s1 + $0xf8] sm:$0xff]
    %64 = vmatpush.msra.mxu0 %v47
    %65 = vmatpush.msra.mxu0 %v46
    %66 = vmatpush.msra.mxu0 %v45
    %67 = vmatpush.msra.mxu0 %v44
    %68 = vmatpush.msra.mxu0 %v43
    %69 = vmatpush.msra.mxu0 %v42
    %70 = vmatpush.msra.mxu0 %v41
    %71 = vmatpush.msra.mxu0 %v40
    %72 = vmatpush.msra.mxu0 %v39
    %73 = vmatpush.msra.mxu0 %v38
    %74 = vmatpush.msra.mxu0 %v37
    %75 = vmatpush.msra.mxu0 %v36
    %76 = vmatpush.msra.mxu0 %v35
    %77 = vmatpush.msra.mxu0 %v34
    %78 = vmatpush.msra.mxu0 %v33
    %79 = vmatpush.msra.mxu0 %v32
    %80 = vmatmul.f32.gmra.mxu0 %v30
    %v81 = vpop.f32.mrf.mxu0
    %v82 = vadd.f32 0.0, %v81
    %83 = vdwg.mxu0
    %84 = vmatpush.msra.mxu0 %v63
    %85 = vmatpush.msra.mxu0 %v62
    %86 = vmatpush.msra.mxu0 %v61
    %87 = vmatpush.msra.mxu0 %v60
    %88 = vmatpush.msra.mxu0 %v59
    %89 = vmatpush.msra.mxu0 %v58
    %90 = vmatpush.msra.mxu0 %v57
    %91 = vmatpush.msra.mxu0 %v56
    %92 = vmatpush.msra.mxu0 %v55
    %93 = vmatpush.msra.mxu0 %v54
    %94 = vmatpush.msra.mxu0 %v53
    %95 = vmatpush.msra.mxu0 %v52
    %96 = vmatpush.msra.mxu0 %v51
    %97 = vmatpush.msra.mxu0 %v50
    %98 = vmatpush.msra.mxu0 %v49
    %99 = vmatpush.msra.mxu0 %v48
    %100 = vmatmul.f32.gmra.mxu0 %v31
    %v101 = vpop.f32.mrf.mxu0
    %v102 = vadd.f32 %v82, %v101
    %103 = vdwg.mxu0
    %vm104 = vcmask 80896
    %105 = vst.msk [vmem:[#allocation2] sm:$0xff] %vm104, %v102
    // Predicated region
    $region10: #{tpu_custom_call.1} parent=1 // pred_check
      _
    $region11: #{tpu_custom_call.1} parent=1 // pred_check_branch
      %107 = sbr.rel (0) target = $region13
    $region12: #{tpu_custom_call.1} parent=1 // pred_region
      %109 = vsyncadd [#allocation3], 0
      %s111 = sshll.u32 [#allocation2], 4
      %s112 = int_to_ptr.vmem [resolvable:$true] %s111
      %s113 = sshll.u32 %s2, 4
      %s114 = int_to_ptr.hbm [resolvable:$true] %s113
      %116 = dma.vmem_to_hbm [thread:$0]  %s112, 128, %s114, [#allocation3]
    $region13: #{tpu_custom_call.1} parent=1 // pred_fallthru
      _
    // Predicated region
    $region14: #{tpu_custom_call.1} parent=1 // pred_check
      _
    $region15: #{tpu_custom_call.1} parent=1 // pred_check_branch
      %118 = sbr.rel (0) target = $region17
    $region16: #{tpu_custom_call.1} parent=1 // pred_region
      %120 = dma.done [#allocation3], 128
    $region17: #{tpu_custom_call.1} parent=1 // pred_fallthru
      _
    %121 = vsyncpa [#allocation3], 1

</llo_original>
